<compile_context>
chip_gen: v7x
topology: tpu7x:2x2x1
jax: 0.10.0
libtpu: 0.0.40
codegen_flags: <defaults>
</compile_context>

<pallas_src>
import functools

import jax
import jax.numpy as jnp
from jax import lax
from jax.experimental import pallas as pl
from jax.experimental.pallas import tpu as pltpu


def _round_up(x, m):
    return (x + m - 1) // m * m


# ---------------------------------------------------------------------------
# Kernel A: tiled GEMM + folded-BN (scale/shift) + optional residual + ReLU.
# Used for the 1x1x1 convolutions of Bottleneck3D.
# ---------------------------------------------------------------------------
def _gemm_bn_kernel_single(*refs, apply_relu, has_residual):
    """Single K tile: no reduction axis, no accumulator scratch."""
    if has_residual:
        x_ref, w_ref, scale_ref, shift_ref, res_ref, o_ref = refs
    else:
        x_ref, w_ref, scale_ref, shift_ref, o_ref = refs
        res_ref = None

    y = jnp.dot(x_ref[...], w_ref[...], preferred_element_type=jnp.float32)
    y = y * scale_ref[...] + shift_ref[...]
    if has_residual:
        y = y + res_ref[...]
    if apply_relu:
        y = jnp.maximum(y, 0.0)
    o_ref[...] = y.astype(o_ref.dtype)


def _gemm_bn_kernel_multi(*refs, apply_relu, has_residual):
    """K grid axis innermost, f32 VMEM accumulator, pl.when init/finalize."""
    if has_residual:
        x_ref, w_ref, scale_ref, shift_ref, res_ref, o_ref, acc_ref = refs
    else:
        x_ref, w_ref, scale_ref, shift_ref, o_ref, acc_ref = refs
        res_ref = None

    k = pl.program_id(2)

    @pl.when(k == 0)
    def _():
        acc_ref[...] = jnp.zeros_like(acc_ref)

    acc_ref[...] += jnp.dot(x_ref[...], w_ref[...],
                            preferred_element_type=jnp.float32)

    @pl.when(k == pl.num_programs(2) - 1)
    def _():
        y = acc_ref[...] * scale_ref[...] + shift_ref[...]
        if has_residual:
            y = y + res_ref[...]
        if apply_relu:
            y = jnp.maximum(y, 0.0)
        o_ref[...] = y.astype(o_ref.dtype)


def pointwise_conv_bn(x_2d, w_2d, scale, shift, residual_2d=None,
                      apply_relu=True, tm=512, tn=256, tk=512):
    """y = act((x @ w) * scale + shift [+ residual]).

    x_2d: (M, K), w_2d: (K, Cout), scale/shift: (Cout,).  All dims are
    zero-padded to 128-aligned, lane-dense tiles; result sliced back.
    """
    M, K = x_2d.shape
    Kw, Cout = w_2d.shape
    assert Kw == K, (Kw, K)

    cout_p = _round_up(Cout, 128)
    tn = min(tn, cout_p)
    tk = min(tk, _round_up(K, 128))
    k_p = _round_up(K, tk)
    m_p = _round_up(M, tm)

    x_p = jnp.pad(x_2d.astype(jnp.float32), ((0, m_p - M), (0, k_p - K)))
    w_p = jnp.pad(w_2d.astype(jnp.float32), ((0, k_p - K), (0, cout_p - Cout)))
    scale_p = jnp.pad(scale.astype(jnp.float32).reshape(1, -1),
                      ((0, 0), (0, cout_p - Cout)))
    shift_p = jnp.pad(shift.astype(jnp.float32).reshape(1, -1),
                      ((0, 0), (0, cout_p - Cout)))

    has_residual = residual_2d is not None
    args = [x_p, w_p, scale_p, shift_p]
    if has_residual:
        res_p = jnp.pad(residual_2d.astype(jnp.float32),
                        ((0, m_p - M), (0, cout_p - Cout)))
        args.append(res_p)

    cost = pl.CostEstimate(
        flops=2 * m_p * k_p * cout_p,
        transcendentals=0,
        bytes_accessed=4 * (m_p * k_p + k_p * cout_p + 2 * m_p * cout_p))

    nk = k_p // tk
    if nk == 1:
        # Fast path: whole reduction fits in one tile -> no scratch, 2-D grid.
        in_specs = [
            pl.BlockSpec((tm, tk), lambda i, j: (i, 0)),
            pl.BlockSpec((tk, tn), lambda i, j: (0, j)),
            pl.BlockSpec((1, tn), lambda i, j: (0, j)),
            pl.BlockSpec((1, tn), lambda i, j: (0, j)),
        ]
        if has_residual:
            in_specs.append(pl.BlockSpec((tm, tn), lambda i, j: (i, j)))
        kernel = functools.partial(_gemm_bn_kernel_single,
                                   apply_relu=apply_relu,
                                   has_residual=has_residual)
        out = pl.pallas_call(
            kernel,
            out_shape=jax.ShapeDtypeStruct((m_p, cout_p), jnp.float32),
            grid_spec=pltpu.PrefetchScalarGridSpec(
                num_scalar_prefetch=0,
                grid=(m_p // tm, cout_p // tn),
                in_specs=in_specs,
                out_specs=pl.BlockSpec((tm, tn), lambda i, j: (i, j)),
            ),
            compiler_params=pltpu.CompilerParams(
                dimension_semantics=("parallel", "parallel")),
            cost_estimate=cost,
        )(*args)
    else:
        in_specs = [
            pl.BlockSpec((tm, tk), lambda i, j, k: (i, k)),
            pl.BlockSpec((tk, tn), lambda i, j, k: (k, j)),
            pl.BlockSpec((1, tn), lambda i, j, k: (0, j)),
            pl.BlockSpec((1, tn), lambda i, j, k: (0, j)),
        ]
        if has_residual:
            in_specs.append(pl.BlockSpec((tm, tn), lambda i, j, k: (i, j)))
        kernel = functools.partial(_gemm_bn_kernel_multi,
                                   apply_relu=apply_relu,
                                   has_residual=has_residual)
        out = pl.pallas_call(
            kernel,
            out_shape=jax.ShapeDtypeStruct((m_p, cout_p), jnp.float32),
            grid_spec=pltpu.PrefetchScalarGridSpec(
                num_scalar_prefetch=0,
                grid=(m_p // tm, cout_p // tn, nk),
                in_specs=in_specs,
                out_specs=pl.BlockSpec((tm, tn), lambda i, j, k: (i, j)),
                scratch_shapes=[pltpu.VMEM((tm, tn), jnp.float32)],
            ),
            compiler_params=pltpu.CompilerParams(
                dimension_semantics=("parallel", "parallel", "arbitrary")),
            cost_estimate=cost,
        )(*args)
    return out[:M, :Cout]


# ---------------------------------------------------------------------------
# Kernel B: fused 3x3x3 conv (padding=1, no bias) + folded BN + ReLU.
# Grid = (N, Dout, KD).  For each (n, d) output slice, one padded (Hp, Wp, Cin)
# input slab is DMA'd per kd tap; the 9 kh/kw taps are unrolled in-kernel and
# accumulate into a (Hout*Wout, Cout_pad) f32 scratch (im2col never hits HBM).
# ---------------------------------------------------------------------------
def _conv3d_tap_bn_kernel(x_ref, w_ref, scale_ref, shift_ref, o_ref, acc_ref,
                          *, kh_taps, kw_taps, hout, wout, sh, sw, apply_relu):
    kd = pl.program_id(2)

    @pl.when(kd == 0)
    def _():
        acc_ref[...] = jnp.zeros_like(acc_ref)

    slab = x_ref[0, 0]                      # (Hp, Wp, Cin) for this (n, d, kd)
    acc = acc_ref[...]
    for kh in range(kh_taps):
        for kw in range(kw_taps):
            if sh == 1 and sw == 1:
                win = slab[kh:kh + hout, kw:kw + wout, :]
            else:
                # NOTE: strided taps (stride > 1); not exercised in the demo.
                win = lax.slice(
                    slab, (kh, kw, 0),
                    (kh + (hout - 1) * sh + 1, kw + (wout - 1) * sw + 1,
                     slab.shape[2]),
                    (sh, sw, 1))
            a = win.reshape(hout * wout, win.shape[-1])      # (HWo, Cin)
            acc = acc + jnp.dot(a, w_ref[0, kh, kw],
                                preferred_element_type=jnp.float32)
    acc_ref[...] = acc

    @pl.when(kd == pl.num_programs(2) - 1)
    def _():
        y = acc * scale_ref[...] + shift_ref[...]
        if apply_relu:
            y = jnp.maximum(y, 0.0)
        o_ref[0, 0] = y.astype(o_ref.dtype)


def conv3d_3x3x3_bn(x_ndhwc, w_taps, scale, shift, stride=1, apply_relu=True,
                    return_padded=False):
    """3x3x3 conv (padding=1, bias-free) + folded BN + ReLU on NDHWC input.

    If return_padded=True, returns the lane-padded (N, Dout, Hout*Wout, Cout_p)
    output plus shape metadata so the consumer can fuse without a slice+re-pad.
    """
    N, D, H, W, Cin = x_ndhwc.shape
    KD, KH, KW, _, Cout = w_taps.shape
    s = stride
    pad = 1
    xp = jnp.pad(x_ndhwc.astype(jnp.float32),
                 ((0, 0), (pad, pad), (pad, pad), (pad, pad), (0, 0)))
    Dp, Hp, Wp = D + 2 * pad, H + 2 * pad, W + 2 * pad
    Dout = (Dp - KD) // s + 1
    Hout = (Hp - KH) // s + 1
    Wout = (Wp - KW) // s + 1
    HWo = Hout * Wout

    cout_p = _round_up(Cout, 128)           # lane-dense output store path
    w_p = jnp.pad(w_taps.astype(jnp.float32),
                  ((0, 0), (0, 0), (0, 0), (0, 0), (0, cout_p - Cout)))
    scale_p = jnp.pad(scale.astype(jnp.float32).reshape(1, -1),
                      ((0, 0), (0, cout_p - Cout)))
    shift_p = jnp.pad(shift.astype(jnp.float32).reshape(1, -1),
                      ((0, 0), (0, cout_p - Cout)))

    kernel = functools.partial(
        _conv3d_tap_bn_kernel, kh_taps=KH, kw_taps=KW, hout=Hout, wout=Wout,
        sh=s, sw=s, apply_relu=apply_relu)

    out = pl.pallas_call(
        kernel,
        out_shape=jax.ShapeDtypeStruct((N, Dout, HWo, cout_p), jnp.float32),
        grid_spec=pltpu.PrefetchScalarGridSpec(
            num_scalar_prefetch=0,
            grid=(N, Dout, KD),
            in_specs=[
                pl.BlockSpec((1, 1, Hp, Wp, Cin),
                             lambda n, d, kd: (n, d * s + kd, 0, 0, 0)),
                pl.BlockSpec((1, KH, KW, Cin, cout_p),
                             lambda n, d, kd: (kd, 0, 0, 0, 0)),
                pl.BlockSpec((1, cout_p), lambda n, d, kd: (0, 0)),
                pl.BlockSpec((1, cout_p), lambda n, d, kd: (0, 0)),
            ],
            out_specs=pl.BlockSpec((1, 1, HWo, cout_p),
                                   lambda n, d, kd: (n, d, 0, 0)),
            scratch_shapes=[pltpu.VMEM((HWo, cout_p), jnp.float32)],
        ),
        compiler_params=pltpu.CompilerParams(
            dimension_semantics=("parallel", "parallel", "arbitrary")),
        cost_estimate=pl.CostEstimate(
            flops=2 * N * Dout * HWo * KD * KH * KW * Cin * cout_p,
            transcendentals=0,
            bytes_accessed=4 * (KD * N * Dout * Hp * Wp * Cin
                                + KD * KH * KW * Cin * cout_p
                                + N * Dout * HWo * cout_p)),
    )(xp, w_p, scale_p, shift_p)

    if return_padded:
        return out, (N, Dout, Hout, Wout, Cout, cout_p)
    return out[:, :, :, :Cout].reshape(N, Dout, Hout, Wout, Cout)


# ---------------------------------------------------------------------------
# Bottleneck3D forward (eval-mode BN folded into per-channel scale/shift).
# ---------------------------------------------------------------------------
def fold_bn(gamma, beta, mean, var, eps=1e-5):
    scale = gamma / jnp.sqrt(var + eps)
    shift = beta - mean * scale
    return scale, shift


def bottleneck3d_forward(x_ncdhw, params, stride=1):
    # TODO(synk): training-mode BatchNorm (batch statistics) is not fused; this
    # is the inference-mode forward using running statistics.
    x = jnp.transpose(x_ncdhw, (0, 2, 3, 4, 1)).astype(jnp.float32)   # NDHWC
    N, D, H, W, Cin = x.shape

    # conv1 (1x1x1) + bn1 + relu  -> pure channel GEMM, fused epilogue
    w1 = params["w1"]                              # (planes, Cin, 1, 1, 1)
    planes = w1.shape[0]
    w1_2d = w1.reshape(planes, Cin).T              # (Cin, planes)
    s1, b1 = fold_bn(*params["bn1"])
    h1 = pointwise_conv_bn(x.reshape(N * D * H * W, Cin), w1_2d, s1, b1,
                           apply_relu=True)
    h1 = h1.reshape(N, D, H, W, planes)

    # conv2 (3x3x3, stride, padding=1) + bn2 + relu -> fused tap-grid kernel.
    # Output stays lane-padded (planes -> 128) and flows straight into conv3.
    w2 = params["w2"]                              # (planes, planes, 3, 3, 3)
    w2_taps = jnp.transpose(w2, (2, 3, 4, 1, 0))   # (KD, KH, KW, Cin, Cout)
    s2, b2 = fold_bn(*params["bn2"])
    h2_pad, (N2, Do, Ho, Wo, c2, c2_p) = conv3d_3x3x3_bn(
        h1, w2_taps, s2, b2, stride=stride, apply_relu=True,
        return_padded=True)
    M2 = N2 * Do * Ho * Wo

    # identity / downsample path
    if params.get("ds_w") is not None:
        xd = x[:, ::stride, ::stride, ::stride, :] if stride != 1 else x
        ds_w = params["ds_w"]                      # (planes*4, Cin, 1, 1, 1)
        ds_2d = ds_w.reshape(ds_w.shape[0], Cin).T
        ds_s, ds_b = fold_bn(*params["ds_bn"])
        identity = pointwise_conv_bn(xd.reshape(M2, Cin), ds_2d, ds_s, ds_b,
                                     apply_relu=False)
    else:
        identity = x.reshape(M2, Cin)              # stride==1, Cin==planes*4

    # conv3 (1x1x1) + bn3 + residual add + relu, all fused in the epilogue.
    # Consumes conv2's lane-padded output directly: the zero-padded channels
    # meet zero-padded weight rows, so no slice/re-pad HBM round trip needed.
    w3 = params["w3"]                              # (planes*4, planes, 1,1,1)
    cout3 = w3.shape[0]
    w3_2d = jnp.pad(w3.reshape(cout3, planes).T.astype(jnp.float32),
                    ((0, c2_p - planes), (0, 0)))  # (c2_p, cout3)
    s3, b3 = fold_bn(*params["bn3"])
    out = pointwise_conv_bn(h2_pad.reshape(M2, c2_p), w3_2d, s3, b3,
                            residual_2d=identity, apply_relu=True)
    out = out.reshape(N2, Do, Ho, Wo, cout3)
    return jnp.transpose(out, (0, 4, 1, 2, 3))     # back to NCDHW


if __name__ == "__main__":
    key = jax.random.PRNGKey(0)
    keys = jax.random.split(key, 8)

    N, in_planes, D, H, W = 2, 16, 8, 8, 8
    planes, expansion = 4, 4
    stride = 1
    assert in_planes == planes * expansion         # identity path (no downsample)

    x = jax.random.normal(keys[0], (N, in_planes, D, H, W), dtype=jnp.float32)

    def bn_params(k, c):
        k1, k2, k3, k4 = jax.random.split(k, 4)
        gamma = jax.random.uniform(k1, (c,), minval=0.5, maxval=1.5)
        beta = 0.1 * jax.random.normal(k2, (c,))
        mean = 0.1 * jax.random.normal(k3, (c,))
        var = jax.random.uniform(k4, (c,), minval=0.5, maxval=1.5)
        return gamma, beta, mean, var

    params = {
        "w1": 0.1 * jax.random.normal(keys[1], (planes, in_planes, 1, 1, 1)),
        "bn1": bn_params(keys[2], planes),
        "w2": 0.1 * jax.random.normal(keys[3], (planes, planes, 3, 3, 3)),
        "bn2": bn_params(keys[4], planes),
        "w3": 0.1 * jax.random.normal(keys[5],
                                      (planes * expansion, planes, 1, 1, 1)),
        "bn3": bn_params(keys[6], planes * expansion),
        "ds_w": None,
    }

    out = bottleneck3d_forward(x, params, stride=stride)
    out = jax.block_until_ready(out)

    # Pure-JAX reference (XLA conv) of the same eval-mode Bottleneck3D forward.
    def bn_ref(y, g, b, m, v, eps=1e-5):
        inv = g / jnp.sqrt(v + eps)
        return (y * inv.reshape(1, -1, 1, 1, 1)
                + (b - m * inv).reshape(1, -1, 1, 1, 1))

    def conv(x_, w_, s_, p_):
        return lax.conv_general_dilated(
            x_, w_, window_strides=(s_,) * 3, padding=[(p_, p_)] * 3,
            dimension_numbers=("NCDHW", "OIDHW", "NCDHW"))

    ref = jnp.maximum(bn_ref(conv(x, params["w1"], 1, 0), *params["bn1"]), 0.0)
    ref = jnp.maximum(bn_ref(conv(ref, params["w2"], stride, 1),
                             *params["bn2"]), 0.0)
    ref = bn_ref(conv(ref, params["w3"], 1, 0), *params["bn3"])
    ref = jnp.maximum(ref + x, 0.0)

    assert out.shape == ref.shape, (out.shape, ref.shape)
    max_err = float(jnp.max(jnp.abs(out - ref)))
    assert jnp.allclose(out, ref, atol=1e-3, rtol=1e-3), max_err
    print("KERNEL_OK")
</pallas_src>

<mosaic_0001>
module attributes {stable_mosaic.version = 11 : i64} {
  func.func @_gemm_bn_kernel_single(%arg0: i32, %arg1: i32, %arg2: memref<512x128xf32, #tpu.memory_space<vmem>>, %arg3: memref<128x128xf32, #tpu.memory_space<vmem>>, %arg4: memref<1x128xf32, #tpu.memory_space<vmem>>, %arg5: memref<1x128xf32, #tpu.memory_space<vmem>>, %arg6: memref<512x128xf32, #tpu.memory_space<vmem>>) attributes {dimension_semantics = [#tpu.dimension_semantics<parallel>, #tpu.dimension_semantics<parallel>], iteration_bounds = array<i64: 2, 1>, scalar_prefetch = 0 : i64, scratch_operands = 0 : i64, tpu.core_type = #tpu.core_type<tc>, window_params = [{transform_indices = @transform_0, window_bounds = array<i64: 512, 128>}, {transform_indices = @transform_1, window_bounds = array<i64: 128, 128>}, {transform_indices = @transform_2, window_bounds = array<i64: 1, 128>}, {transform_indices = @transform_3, window_bounds = array<i64: 1, 128>}, {transform_indices = @transform_4, window_bounds = array<i64: 512, 128>}]} {
    %c0 = arith.constant 0 : index
    %c0_0 = arith.constant 0 : index
    %0 = vector.load %arg2[%c0, %c0_0] : memref<512x128xf32, #tpu.memory_space<vmem>>, vector<512x128xf32>
    %c0_1 = arith.constant 0 : index
    %c0_2 = arith.constant 0 : index
    %1 = vector.load %arg3[%c0_1, %c0_2] : memref<128x128xf32, #tpu.memory_space<vmem>>, vector<128x128xf32>
    %cst = arith.constant dense<0.000000e+00> : vector<512x128xf32>
    %2 = tpu.matmul %0, %1, %cst {dimension_numbers = #tpu.dot_dimension_numbers<[1], [0], [0], [1], [0, 0, 1, 1], [], []>} : vector<512x128xf32>, vector<128x128xf32>, vector<512x128xf32> -> vector<512x128xf32>
    %c0_3 = arith.constant 0 : index
    %c0_4 = arith.constant 0 : index
    %3 = vector.load %arg4[%c0_3, %c0_4] : memref<1x128xf32, #tpu.memory_space<vmem>>, vector<1x128xf32>
    %4 = vector.broadcast %3 : vector<1x128xf32> to vector<512x128xf32>
    %5 = arith.mulf %2, %4 : vector<512x128xf32>
    %c0_5 = arith.constant 0 : index
    %c0_6 = arith.constant 0 : index
    %6 = vector.load %arg5[%c0_5, %c0_6] : memref<1x128xf32, #tpu.memory_space<vmem>>, vector<1x128xf32>
    %7 = vector.broadcast %6 : vector<1x128xf32> to vector<512x128xf32>
    %8 = arith.addf %5, %7 : vector<512x128xf32>
    %cst_7 = arith.constant 0.000000e+00 : f32
    %9 = vector.broadcast %cst_7 : f32 to vector<512x128xf32>
    %10 = arith.maximumf %8, %9 : vector<512x128xf32>
    %c0_8 = arith.constant 0 : index
    %c0_9 = arith.constant 0 : index
    %11 = vector.load %arg6[%c0_8, %c0_9] : memref<512x128xf32, #tpu.memory_space<vmem>>, vector<512x128xf32>
    tpu.vector_store %arg6[%c0_8, %c0_9], %10 {strides = array<i32>} : memref<512x128xf32, #tpu.memory_space<vmem>>, vector<512x128xf32>,
    return
  }
  func.func @transform_0(%arg0: i32, %arg1: i32) -> (i32, i32) {
    %c0_i32 = arith.constant 0 : i32
    %c0_i32_0 = arith.constant 0 : i32
    return %arg0, %c0_i32 : i32, i32
  }
  func.func @transform_1(%arg0: i32, %arg1: i32) -> (i32, i32) {
    %c0_i32 = arith.constant 0 : i32
    %c0_i32_0 = arith.constant 0 : i32
    return %c0_i32, %arg1 : i32, i32
  }
  func.func @transform_2(%arg0: i32, %arg1: i32) -> (i32, i32) {
    %c0_i32 = arith.constant 0 : i32
    %c0_i32_0 = arith.constant 0 : i32
    return %c0_i32, %arg1 : i32, i32
  }
  func.func @transform_3(%arg0: i32, %arg1: i32) -> (i32, i32) {
    %c0_i32 = arith.constant 0 : i32
    %c0_i32_0 = arith.constant 0 : i32
    return %c0_i32, %arg1 : i32, i32
  }
  func.func @transform_4(%arg0: i32, %arg1: i32) -> (i32, i32) {
    %c0_i32 = arith.constant 0 : i32
    return %arg0, %arg1 : i32, i32
  }
}

</mosaic_0001>

<llo_original>
// kernel: tpu_custom_call.1
$region0: #{tpu_custom_call.1}
  #allocation0 [shape = 'u32[]', space=smem, size = 0x4, offset = 0x4, fixed_abs, tag = 'smem constant byte address 0x4 - core index']
  #allocation1 [shape = 'u32[144,128]{1,0:T(1,128)}', space=vmem, size = 0x12000, scoped, tag = 'internal scratch']
  %s0 = inlined_call_operand.hbm [shape: f32[1024,128], index: 0, kind: input, shape index: {}]
  %s1 = inlined_call_operand.hbm [shape: f32[128,128], index: 1, kind: input, shape index: {}]
  %s2 = inlined_call_operand.vmem [shape: f32[1,128], index: 2, kind: input, shape index: {}]
  %s3 = inlined_call_operand.vmem [shape: f32[1,128], index: 3, kind: input, shape index: {}]
  %s4 = inlined_call_operand.hbm [shape: f32[1024,128], index: 4, kind: output, shape index: {}]
  %s5 = sld [smem:[#allocation0]]
  $region57: #{tpu_custom_call.1} parent=0
    _
  %s7 = ssub.s32 1, %s5
  %s8 = scalar_select 0, %s7, %s5
  $region1: #{tpu_custom_call.1} parent=0
    #allocation2 [shape = 'u8[524288]{0}', space=vmem, size = 0x80000, scoped, tag = 'input window, operand 0']
    #allocation3 [shape = 's32[2]{0}', space=sflag, size = 0x8, scoped, tag = 'scoped memory for tpu_custom_call.1']
    #allocation4 [shape = 's32[2]{0}', space=sflag, size = 0x8, scoped, tag = 'scoped memory for tpu_custom_call.1']
    #allocation5 [shape = 'u8[65536]{0}', space=vmem, size = 0x10000, scoped, tag = 'input window, operand 1, single buffered']
    #allocation6 [shape = 's32[1]{0}', space=sflag, size = 0x4, scoped, tag = 'scoped memory for tpu_custom_call.1']
    #allocation7 [shape = 'u8[524288]{0}', space=vmem, size = 0x80000, scoped, tag = 'output window, operand 0']
    %9 = vsyncpa [#allocation3], 0
    %s10 = scalar_lea.sflag [#allocation3], 1
    %11 = vsyncpa %s10, 0
    %12 = vsyncpa [#allocation6], 0
    %13 = vsyncpa [#allocation4], 0
    %s14 = scalar_lea.sflag [#allocation4], 1
    %15 = vsyncpa %s14, 0
    loop: start=0, step=1, limit=4
    $region2: #{tpu_custom_call.1} parent=1 // loop_pre_header
      _
    $region3: #{tpu_custom_call.1} parent=1 // loop_header
      %s17 = sphi 0, %s21
      %p18 = scmp.ge.s32.totalorder %s17, 4
      %s24 = sphi 0, %s36
      %s25 = sphi 0, %s32
      %s26 = sphi 0, %s24
      %s27 = sphi 0, %s25
      %s28 = sphi 0, %s26
      %s29 = sphi 0, %s27
      %s39 = sphi 0, %s41
      %s42 = sphi 0, %s39
      %s43 = sphi 0, %s42
      %s59 = sphi 0, %s43
      %s65 = sphi 0, %s67
      %s68 = sphi 0, %s65
      %s69 = sphi 0, %s68
      %s85 = sphi 0, %s69
      %s91 = sphi 0, %s93
      %s94 = sphi 0, %s91
      %s95 = sphi 0, %s94
      %s111 = sphi 0, %s95
      %s117 = sphi 0, %s119
      %s120 = sphi 0, %s117
      %s121 = sphi 0, %s120
      %s137 = sphi 0, %s121
      %s145 = sphi 0, %s147
      %s148 = sphi 0, %s145
      %s149 = sphi 0, %s148
      %s165 = sphi 0, %s149
    $region4: #{tpu_custom_call.1} parent=1 // loop_header_branch
      %20 = sbr.rel (%p18) target = $region8
    $region5: #{tpu_custom_call.1} parent=1 // loop_body
      %s22 = ssub.s32 %s17, 1
      %s23 = ssub.s32 %s17, 2
      %s30 = sadd.s32 1, %s25
      %p31 = scmp.ge.s32.totalorder %s30, 1
      %s32 = scalar_select %p31, 0, %s30
      %s33 = sadd.s32 1, %s24
      %s34 = scalar_select %p31, %s33, %s24
      %p35 = scmp.ge.s32.totalorder %s34, 2
      %s36 = scalar_select %p35, 0, %s34
      %s37 = ssub.s32 %s24, %s36
      %p38 = scmp.eq.s32.totalorder %s37, 0
      %s40 = sadd.s32 %s39, 1
      %s41 = scalar_select %p38, %s39, %s40
      %p44 = pneg %p38
      %p45 = scmp.eq.s32.totalorder %s17, 1
      %p46 = por %p44, %p45
      %p47 = scmp.ne.s32.totalorder %s39, %s42
      %p48 = scmp.eq.s32.totalorder %s17, 0
      %p49 = por %p47, %p48
      %p50 = scmp.ne.s32.totalorder %s39, %s42
      %p51 = scmp.eq.s32.totalorder %s22, 1
      %p52 = por %p50, %p51
      %p53 = scmp.ne.s32.totalorder %s42, %s43
      %p54 = scmp.eq.s32.totalorder %s22, 0
      %p55 = por %p53, %p54
      %p56 = scmp.ne.s32.totalorder %s42, %s43
      %p57 = scmp.eq.s32.totalorder %s23, 1
      %p58 = por %p56, %p57
      %p60 = scmp.ne.s32.totalorder %s43, %s59
      %p61 = scmp.eq.s32.totalorder %s23, 0
      %p62 = por %p60, %p61
      %s63 = ssub.s32 %s25, %s32
      %p64 = scmp.eq.s32.totalorder %s63, 0
      %s66 = sadd.s32 %s65, 1
      %s67 = scalar_select %p64, %s65, %s66
      %p70 = pneg %p64
      %p71 = scmp.eq.s32.totalorder %s17, 1
      %p72 = por %p70, %p71
      %p73 = scmp.ne.s32.totalorder %s65, %s68
      %p74 = scmp.eq.s32.totalorder %s17, 0
      %p75 = por %p73, %p74
      %p76 = scmp.ne.s32.totalorder %s65, %s68
      %p77 = scmp.eq.s32.totalorder %s22, 1
      %p78 = por %p76, %p77
      %p79 = scmp.ne.s32.totalorder %s68, %s69
      %p80 = scmp.eq.s32.totalorder %s22, 0
      %p81 = por %p79, %p80
      %p82 = scmp.ne.s32.totalorder %s68, %s69
      %p83 = scmp.eq.s32.totalorder %s23, 1
      %p84 = por %p82, %p83
      %p86 = scmp.ne.s32.totalorder %s69, %s85
      %p87 = scmp.eq.s32.totalorder %s23, 0
      %p88 = por %p86, %p87
      %s89 = ssub.s32 %s25, %s32
      %p90 = scmp.eq.s32.totalorder %s89, 0
      %s92 = sadd.s32 %s91, 1
      %s93 = scalar_select %p90, %s91, %s92
      %p96 = pneg %p90
      %p97 = scmp.eq.s32.totalorder %s17, 1
      %p98 = por %p96, %p97
      %p99 = scmp.ne.s32.totalorder %s91, %s94
      %p100 = scmp.eq.s32.totalorder %s17, 0
      %p101 = por %p99, %p100
      %p102 = scmp.ne.s32.totalorder %s91, %s94
      %p103 = scmp.eq.s32.totalorder %s22, 1
      %p104 = por %p102, %p103
      %p105 = scmp.ne.s32.totalorder %s94, %s95
      %p106 = scmp.eq.s32.totalorder %s22, 0
      %p107 = por %p105, %p106
      %p108 = scmp.ne.s32.totalorder %s94, %s95
      %p109 = scmp.eq.s32.totalorder %s23, 1
      %p110 = por %p108, %p109
      %p112 = scmp.ne.s32.totalorder %s95, %s111
      %p113 = scmp.eq.s32.totalorder %s23, 0
      %p114 = por %p112, %p113
      %s115 = ssub.s32 %s25, %s32
      %p116 = scmp.eq.s32.totalorder %s115, 0
      %s118 = sadd.s32 %s117, 1
      %s119 = scalar_select %p116, %s117, %s118
      %p122 = pneg %p116
      %p123 = scmp.eq.s32.totalorder %s17, 1
      %p124 = por %p122, %p123
      %p125 = scmp.ne.s32.totalorder %s117, %s120
      %p126 = scmp.eq.s32.totalorder %s17, 0
      %p127 = por %p125, %p126
      %p128 = scmp.ne.s32.totalorder %s117, %s120
      %p129 = scmp.eq.s32.totalorder %s22, 1
      %p130 = por %p128, %p129
      %p131 = scmp.ne.s32.totalorder %s120, %s121
      %p132 = scmp.eq.s32.totalorder %s22, 0
      %p133 = por %p131, %p132
      %p134 = scmp.ne.s32.totalorder %s120, %s121
      %p135 = scmp.eq.s32.totalorder %s23, 1
      %p136 = por %p134, %p135
      %p138 = scmp.ne.s32.totalorder %s121, %s137
      %p139 = scmp.eq.s32.totalorder %s23, 0
      %p140 = por %p138, %p139
      %s141 = ssub.s32 %s24, %s36
      %s142 = ssub.s32 %s25, %s32
      %s143 = sor.u32 %s141, %s142
      %p144 = scmp.eq.s32.totalorder %s143, 0
      %s146 = sadd.s32 %s145, 1
      %s147 = scalar_select %p144, %s145, %s146
      %p150 = pneg %p144
      %p151 = scmp.eq.s32.totalorder %s17, 1
      %p152 = por %p150, %p151
      %p153 = scmp.ne.s32.totalorder %s145, %s148
      %p154 = scmp.eq.s32.totalorder %s17, 0
      %p155 = por %p153, %p154
      %p156 = scmp.ne.s32.totalorder %s145, %s148
      %p157 = scmp.eq.s32.totalorder %s22, 1
      %p158 = por %p156, %p157
      %p159 = scmp.ne.s32.totalorder %s148, %s149
      %p160 = scmp.eq.s32.totalorder %s22, 0
      %p161 = por %p159, %p160
      %p162 = scmp.ne.s32.totalorder %s148, %s149
      %p163 = scmp.eq.s32.totalorder %s23, 1
      %p164 = por %p162, %p163
      %p166 = scmp.ne.s32.totalorder %s149, %s165
      %p167 = scmp.eq.s32.totalorder %s23, 0
      %p168 = por %p166, %p167
      %p169 = scmp.le.s32.totalorder 1, %s17
      %p170 = scmp.lt.s32.totalorder %s17, 3
      %p171 = pnand %p169, %p170
      %p172 = pneg %p171
      // Predicated region
      $region9: #{tpu_custom_call.1} parent=5 // pred_check
        _
      $region10: #{tpu_custom_call.1} parent=5 // pred_check_branch
        %174 = sbr.rel (%p171) target = $region12
      $region11: #{tpu_custom_call.1} parent=5 // pred_region
        %s175 = ssub.s32 %s17, 1
        // Predicated region
        $region13: #{tpu_custom_call.1} parent=11 // pred_check
          %p176 = pneg %p81
        $region14: #{tpu_custom_call.1} parent=11 // pred_check_branch
          %178 = sbr.rel (%p176) target = $region16
        $region15: #{tpu_custom_call.1} parent=11 // pred_region
          %s180 = ssub.s32 2048, 2048
          %181 = vsyncadd [#allocation6], %s180
          %s182 = smul.addr %s27, 128
          %s183 = scalar_lea.hbm %s1, %s182
          %s184 = sshll.u32 [#allocation5], 4
          %s185 = int_to_ptr.vmem [resolvable:$true] %s184
          %190 = dma.hbm_to_vmem [thread:$0]  %s183, 2048, %s185, [#allocation6], 128, 128, 8
        $region16: #{tpu_custom_call.1} parent=11 // pred_fallthru
          _
        // Predicated region
        $region17: #{tpu_custom_call.1} parent=11 // pred_check
          %p191 = pneg %p107
        $region18: #{tpu_custom_call.1} parent=11 // pred_check_branch
          %193 = sbr.rel (%p191) target = $region20
        $region19: #{tpu_custom_call.1} parent=11 // pred_region
          %p194 = scmp.lt.s32.totalorder %s27, 0
          %s195 = scalar_select %p194, %s27, 0
          %s196 = scalar_lea.vmem %s2, %s195
        $region20: #{tpu_custom_call.1} parent=11 // pred_fallthru
          _
        // Predicated region
        $region21: #{tpu_custom_call.1} parent=11 // pred_check
          %p197 = pneg %p133
        $region22: #{tpu_custom_call.1} parent=11 // pred_check_branch
          %199 = sbr.rel (%p197) target = $region24
        $region23: #{tpu_custom_call.1} parent=11 // pred_region
          %p200 = scmp.lt.s32.totalorder %s27, 0
          %s201 = scalar_select %p200, %s27, 0
          %s202 = scalar_lea.vmem %s3, %s201
        $region24: #{tpu_custom_call.1} parent=11 // pred_fallthru
          _
      $region12: #{tpu_custom_call.1} parent=5 // pred_fallthru
        _
      %p203 = scmp.lt.s32.totalorder %s17, 2
      // Predicated region
      $region25: #{tpu_custom_call.1} parent=5 // pred_check
        %p204 = pneg %p203
      $region26: #{tpu_custom_call.1} parent=5 // pred_check_branch
        %206 = sbr.rel (%p204) target = $region28
      $region27: #{tpu_custom_call.1} parent=5 // pred_region
        // Predicated region
        $region29: #{tpu_custom_call.1} parent=27 // pred_check
          %p207 = pneg %p49
        $region30: #{tpu_custom_call.1} parent=27 // pred_check_branch
          %209 = sbr.rel (%p207) target = $region32
        $region31: #{tpu_custom_call.1} parent=27 // pred_region
          %s210 = sand.u32 %s39, 1
          %s211 = scalar_lea.sflag [#allocation3], %s210
          %s212 = sand.u32 %s39, 1
          %s213 = smul.addr %s212, 512
          %s214 = scalar_lea.vmem [#allocation2], %s213
          %s215 = smul.u32 64, %s24
          %s217 = ssub.s32 8192, 8192
          %218 = vsyncadd %s211, %s217
          %s219 = smul.addr %s215, 128
          %s220 = scalar_lea.hbm %s0, %s219
          %s221 = sshll.u32 %s214, 4
          %s222 = int_to_ptr.vmem [resolvable:$true] %s221
          %227 = dma.hbm_to_vmem [thread:$0]  %s220, 8192, %s222, %s211, 128, 128, 8
        $region32: #{tpu_custom_call.1} parent=27 // pred_fallthru
          _
      $region28: #{tpu_custom_call.1} parent=5 // pred_fallthru
        _
      %p228 = scmp.le.s32.totalorder 1, %s17
      %p229 = scmp.lt.s32.totalorder %s17, 3
      %p230 = pnand %p228, %p229
      %p231 = pneg %p230
      // Predicated region
      $region33: #{tpu_custom_call.1} parent=5 // pred_check
        _
      $region34: #{tpu_custom_call.1} parent=5 // pred_check_branch
        %233 = sbr.rel (%p230) target = $region36
      $region35: #{tpu_custom_call.1} parent=5 // pred_region
        %s234 = ssub.s32 %s17, 1
        %s235 = sand.u32 %s42, 1
        %s236 = scalar_lea.sflag [#allocation3], %s235
        %s237 = sand.u32 %s42, 1
        %s238 = smul.addr %s237, 512
        %s239 = scalar_lea.vmem [#allocation2], %s238
        // Predicated region
        $region37: #{tpu_custom_call.1} parent=35 // pred_check
          %p240 = pneg %p55
        $region38: #{tpu_custom_call.1} parent=35 // pred_check_branch
          %242 = sbr.rel (%p240) target = $region40
        $region39: #{tpu_custom_call.1} parent=35 // pred_region
          %243 = dma.done %s236, 8192
        $region40: #{tpu_custom_call.1} parent=35 // pred_fallthru
          _
        // Predicated region
        $region41: #{tpu_custom_call.1} parent=35 // pred_check
          %p244 = pneg %p81
        $region42: #{tpu_custom_call.1} parent=35 // pred_check_branch
          %246 = sbr.rel (%p244) target = $region44
        $region43: #{tpu_custom_call.1} parent=35 // pred_region
          %247 = dma.done [#allocation6], 2048
        $region44: #{tpu_custom_call.1} parent=35 // pred_fallthru
          _
        %s248 = sand.u32 %s42, 1
        %s249 = scalar_lea.sflag [#allocation3], %s248
        %s250 = sand.u32 %s42, 1
        %s251 = smul.addr %s250, 512
        %s252 = scalar_lea.vmem [#allocation2], %s251
        %p253 = pneg %p55
        %p254 = pneg %p52
        %p255 = pneg %p81
        %p256 = pneg %p78
        %p257 = scmp.lt.s32.totalorder %s27, 0
        %s258 = scalar_select %p257, %s27, 0
        %s259 = scalar_lea.vmem %s2, %s258
        %p260 = pneg %p107
        %p261 = pneg %p104
        %p262 = scmp.lt.s32.totalorder %s27, 0
        %s263 = scalar_select %p262, %s27, 0
        %s264 = scalar_lea.vmem %s3, %s263
        %p265 = pneg %p133
        %p266 = pneg %p130
        %p267 = pneg %p161
        %p268 = pneg %p158
        %s269 = sand.u32 %s148, 1
        %s270 = scalar_lea.sflag [#allocation4], %s269
        %s271 = sand.u32 %s148, 1
        %s272 = smul.addr %s271, 512
        %s273 = scalar_lea.vmem [#allocation7], %s272
        %s274 = smul.u32 64, %s26
        %p275 = scmp.lt.s32.totalorder %s27, 0
        %s276 = scalar_select %p275, %s27, 0
        %s277 = scalar_lea.vmem %s2, %s276
        %p278 = scmp.lt.s32.totalorder %s27, 0
        %s279 = scalar_select %p278, %s27, 0
        %s280 = scalar_lea.vmem %s3, %s279
        %s281 = smul.u32 64, %s26
        %v282 = vld [vmem:[%s239] sm:$0xff]
        %v283 = vld [vmem:[%s239 + $0x8] sm:$0xff]
        %v284 = vld [vmem:[%s239 + $0x10] sm:$0xff]
        %v285 = vld [vmem:[%s239 + $0x18] sm:$0xff]
        %v286 = vld [vmem:[%s239 + $0x20] sm:$0xff]
        %v287 = vld [vmem:[%s239 + $0x28] sm:$0xff]
        %v288 = vld [vmem:[%s239 + $0x30] sm:$0xff]
        %v289 = vld [vmem:[%s239 + $0x38] sm:$0xff]
        %v290 = vld [vmem:[%s239 + $0x40] sm:$0xff]
        %v291 = vld [vmem:[%s239 + $0x48] sm:$0xff]
        %v292 = vld [vmem:[%s239 + $0x50] sm:$0xff]
        %v293 = vld [vmem:[%s239 + $0x58] sm:$0xff]
        %v294 = vld [vmem:[%s239 + $0x60] sm:$0xff]
        %v295 = vld [vmem:[%s239 + $0x68] sm:$0xff]
        %v296 = vld [vmem:[%s239 + $0x70] sm:$0xff]
        %v297 = vld [vmem:[%s239 + $0x78] sm:$0xff]
        %v298 = vld [vmem:[%s239 + $0x80] sm:$0xff]
        %v299 = vld [vmem:[%s239 + $0x88] sm:$0xff]
        %v300 = vld [vmem:[%s239 + $0x90] sm:$0xff]
        %v301 = vld [vmem:[%s239 + $0x98] sm:$0xff]
        %v302 = vld [vmem:[%s239 + $0xa0] sm:$0xff]
        %v303 = vld [vmem:[%s239 + $0xa8] sm:$0xff]
        %v304 = vld [vmem:[%s239 + $0xb0] sm:$0xff]
        %v305 = vld [vmem:[%s239 + $0xb8] sm:$0xff]
        %v306 = vld [vmem:[%s239 + $0xc0] sm:$0xff]
        %v307 = vld [vmem:[%s239 + $0xc8] sm:$0xff]
        %v308 = vld [vmem:[%s239 + $0xd0] sm:$0xff]
        %v309 = vld [vmem:[%s239 + $0xd8] sm:$0xff]
        %v310 = vld [vmem:[%s239 + $0xe0] sm:$0xff]
        %v311 = vld [vmem:[%s239 + $0xe8] sm:$0xff]
        %v312 = vld [vmem:[%s239 + $0xf0] sm:$0xff]
        %v313 = vld [vmem:[%s239 + $0xf8] sm:$0xff]
        %v314 = vld [vmem:[%s239 + $0x100] sm:$0xff]
        %v315 = vld [vmem:[%s239 + $0x108] sm:$0xff]
        %v316 = vld [vmem:[%s239 + $0x110] sm:$0xff]
        %v317 = vld [vmem:[%s239 + $0x118] sm:$0xff]
        %v318 = vld [vmem:[%s239 + $0x120] sm:$0xff]
        %v319 = vld [vmem:[%s239 + $0x128] sm:$0xff]
        %v320 = vld [vmem:[%s239 + $0x130] sm:$0xff]
        %v321 = vld [vmem:[%s239 + $0x138] sm:$0xff]
        %v322 = vld [vmem:[%s239 + $0x140] sm:$0xff]
        %v323 = vld [vmem:[%s239 + $0x148] sm:$0xff]
        %v324 = vld [vmem:[%s239 + $0x150] sm:$0xff]
        %v325 = vld [vmem:[%s239 + $0x158] sm:$0xff]
        %v326 = vld [vmem:[%s239 + $0x160] sm:$0xff]
        %v327 = vld [vmem:[%s239 + $0x168] sm:$0xff]
        %v328 = vld [vmem:[%s239 + $0x170] sm:$0xff]
        %v329 = vld [vmem:[%s239 + $0x178] sm:$0xff]
        %v330 = vld [vmem:[%s239 + $0x180] sm:$0xff]
        %v331 = vld [vmem:[%s239 + $0x188] sm:$0xff]
        %v332 = vld [vmem:[%s239 + $0x190] sm:$0xff]
        %v333 = vld [vmem:[%s239 + $0x198] sm:$0xff]
        %v334 = vld [vmem:[%s239 + $0x1a0] sm:$0xff]
        %v335 = vld [vmem:[%s239 + $0x1a8] sm:$0xff]
        %v336 = vld [vmem:[%s239 + $0x1b0] sm:$0xff]
        %v337 = vld [vmem:[%s239 + $0x1b8] sm:$0xff]
        %v338 = vld [vmem:[%s239 + $0x1c0] sm:$0xff]
        %v339 = vld [vmem:[%s239 + $0x1c8] sm:$0xff]
        %v340 = vld [vmem:[%s239 + $0x1d0] sm:$0xff]
        %v341 = vld [vmem:[%s239 + $0x1d8] sm:$0xff]
        %v342 = vld [vmem:[%s239 + $0x1e0] sm:$0xff]
        %v343 = vld [vmem:[%s239 + $0x1e8] sm:$0xff]
        %v344 = vld [vmem:[%s239 + $0x1f0] sm:$0xff]
        %v345 = vld [vmem:[%s239 + $0x1f8] sm:$0xff]
        %v346 = vld [vmem:[#allocation5] sm:$0xff]
        %v347 = vld [vmem:[#allocation5 + $0x8] sm:$0xff]
        %v348 = vld [vmem:[#allocation5 + $0x10] sm:$0xff]
        %v349 = vld [vmem:[#allocation5 + $0x18] sm:$0xff]
        %v350 = vld [vmem:[#allocation5 + $0x20] sm:$0xff]
        %v351 = vld [vmem:[#allocation5 + $0x28] sm:$0xff]
        %v352 = vld [vmem:[#allocation5 + $0x30] sm:$0xff]
        %v353 = vld [vmem:[#allocation5 + $0x38] sm:$0xff]
        %v354 = vld [vmem:[#allocation5 + $0x40] sm:$0xff]
        %v355 = vld [vmem:[#allocation5 + $0x48] sm:$0xff]
        %v356 = vld [vmem:[#allocation5 + $0x50] sm:$0xff]
        %v357 = vld [vmem:[#allocation5 + $0x58] sm:$0xff]
        %v358 = vld [vmem:[#allocation5 + $0x60] sm:$0xff]
        %v359 = vld [vmem:[#allocation5 + $0x68] sm:$0xff]
        %v360 = vld [vmem:[#allocation5 + $0x70] sm:$0xff]
        %v361 = vld [vmem:[#allocation5 + $0x78] sm:$0xff]
        %362 = vmatprep.subr.mxu0 0.0
        %363 = vmatpush1.msra.mxu0 %v346
        %364 = vmatprep.subr.mxu0 0.0
        %365 = vmatpush1.msra.mxu0 %v347
        %366 = vmatprep.subr.mxu0 0.0
        %367 = vmatpush1.msra.mxu0 %v348
        %368 = vmatprep.subr.mxu0 0.0
        %369 = vmatpush1.msra.mxu0 %v349
        %370 = vmatprep.subr.mxu0 0.0
        %371 = vmatpush1.msra.mxu0 %v350
        %372 = vmatprep.subr.mxu0 0.0
        %373 = vmatpush1.msra.mxu0 %v351
        %374 = vmatprep.subr.mxu0 0.0
        %375 = vmatpush1.msra.mxu0 %v352
        %376 = vmatprep.subr.mxu0 0.0
        %377 = vmatpush1.msra.mxu0 %v353
        %378 = vmatprep.subr.mxu0 0.0
        %379 = vmatpush1.msra.mxu0 %v354
        %380 = vmatprep.subr.mxu0 0.0
        %381 = vmatpush1.msra.mxu0 %v355
        %382 = vmatprep.subr.mxu0 0.0
        %383 = vmatpush1.msra.mxu0 %v356
        %384 = vmatprep.subr.mxu0 0.0
        %385 = vmatpush1.msra.mxu0 %v357
        %386 = vmatprep.subr.mxu0 0.0
        %387 = vmatpush1.msra.mxu0 %v358
        %388 = vmatprep.subr.mxu0 0.0
        %389 = vmatpush1.msra.mxu0 %v359
        %390 = vmatprep.subr.mxu0 0.0
        %391 = vmatpush1.msra.mxu0 %v360
        %392 = vmatprep.subr.mxu0 0.0
        %393 = vmatpush1.msra.mxu0 %v361
        %394 = vmatprep.subr.mxu0 0.0
        %395 = vmatpush1.msra.mxu0 0.0
        %396 = vmatprep.subr.mxu0 0.0
        %397 = vmatpush1.msra.mxu0 0.0
        %398 = vmatprep.subr.mxu0 0.0
        %399 = vmatpush1.msra.mxu0 0.0
        %400 = vmatprep.subr.mxu0 0.0
        %401 = vmatpush1.msra.mxu0 0.0
        %402 = vmatprep.subr.mxu0 0.0
        %403 = vmatpush1.msra.mxu0 0.0
        %404 = vmatprep.subr.mxu0 0.0
        %405 = vmatpush1.msra.mxu0 0.0
        %406 = vmatprep.subr.mxu0 0.0
        %407 = vmatpush1.msra.mxu0 0.0
        %408 = vmatprep.subr.mxu0 0.0
        %409 = vmatpush1.msra.mxu0 0.0
        %410 = vmatprep.subr.mxu0 0.0
        %411 = vmatpush1.msra.mxu0 0.0
        %412 = vmatprep.subr.mxu0 0.0
        %413 = vmatpush1.msra.mxu0 0.0
        %414 = vmatprep.subr.mxu0 0.0
        %415 = vmatpush1.msra.mxu0 0.0
        %416 = vmatprep.subr.mxu0 0.0
        %417 = vmatpush1.msra.mxu0 0.0
        %418 = vmatprep.subr.mxu0 0.0
        %419 = vmatpush1.msra.mxu0 0.0
        %420 = vmatprep.subr.mxu0 0.0
        %421 = vmatpush1.msra.mxu0 0.0
        %422 = vmatprep.subr.mxu0 0.0
        %423 = vmatpush1.msra.mxu0 0.0
        %424 = vmatprep.subr.mxu0 0.0
        %425 = vmatpush1.msra.mxu0 0.0
        %426 = vmatprep.mubr.f32.mxu0 0.0
        %427 = vmatmul.mubr.f32.gmra.mrb[0].mxu0 %v282
        %v428 = vpop.f32.mrb[0].mxu0
        %v429 = vadd.f32 0.0, %v428
        %v430 = vpop.f32.mrb[0].mxu0
        %431 = vmatprep.mubr.f32.mxu0 0.0
        %432 = vmatmul.mubr.f32.gmra.mrb[0].mxu0 %v283
        %v433 = vpop.f32.mrb[0].mxu0
        %v434 = vadd.f32 0.0, %v433
        %v435 = vpop.f32.mrb[0].mxu0
        %436 = vmatprep.mubr.f32.mxu0 0.0
        %437 = vmatmul.mubr.f32.gmra.mrb[0].mxu0 %v284
        %v438 = vpop.f32.mrb[0].mxu0
        %v439 = vadd.f32 0.0, %v438
        %v440 = vpop.f32.mrb[0].mxu0
        %441 = vmatprep.mubr.f32.mxu0 0.0
        %442 = vmatmul.mubr.f32.gmra.mrb[0].mxu0 %v285
        %v443 = vpop.f32.mrb[0].mxu0
        %v444 = vadd.f32 0.0, %v443
        %v445 = vpop.f32.mrb[0].mxu0
        %446 = vmatprep.mubr.f32.mxu0 0.0
        %447 = vmatmul.mubr.f32.gmra.mrb[0].mxu0 %v286
        %v448 = vpop.f32.mrb[0].mxu0
        %v449 = vadd.f32 0.0, %v448
        %v450 = vpop.f32.mrb[0].mxu0
        %451 = vmatprep.mubr.f32.mxu0 0.0
        %452 = vmatmul.mubr.f32.gmra.mrb[0].mxu0 %v287
        %v453 = vpop.f32.mrb[0].mxu0
        %v454 = vadd.f32 0.0, %v453
        %v455 = vpop.f32.mrb[0].mxu0
        %456 = vmatprep.mubr.f32.mxu0 0.0
        %457 = vmatmul.mubr.f32.gmra.mrb[0].mxu0 %v288
        %v458 = vpop.f32.mrb[0].mxu0
        %v459 = vadd.f32 0.0, %v458
        %v460 = vpop.f32.mrb[0].mxu0
        %461 = vmatprep.mubr.f32.mxu0 0.0
        %462 = vmatmul.mubr.f32.gmra.mrb[0].mxu0 %v289
        %v463 = vpop.f32.mrb[0].mxu0
        %v464 = vadd.f32 0.0, %v463
        %v465 = vpop.f32.mrb[0].mxu0
        %466 = vmatprep.mubr.f32.mxu0 0.0
        %467 = vmatmul.mubr.f32.gmra.mrb[0].mxu0 %v290
        %v468 = vpop.f32.mrb[0].mxu0
        %v469 = vadd.f32 0.0, %v468
        %v470 = vpop.f32.mrb[0].mxu0
        %471 = vmatprep.mubr.f32.mxu0 0.0
        %472 = vmatmul.mubr.f32.gmra.mrb[0].mxu0 %v291
        %v473 = vpop.f32.mrb[0].mxu0
        %v474 = vadd.f32 0.0, %v473
        %v475 = vpop.f32.mrb[0].mxu0
        %476 = vmatprep.mubr.f32.mxu0 0.0
        %477 = vmatmul.mubr.f32.gmra.mrb[0].mxu0 %v292
        %v478 = vpop.f32.mrb[0].mxu0
        %v479 = vadd.f32 0.0, %v478
        %v480 = vpop.f32.mrb[0].mxu0
        %481 = vmatprep.mubr.f32.mxu0 0.0
        %482 = vmatmul.mubr.f32.gmra.mrb[0].mxu0 %v293
        %v483 = vpop.f32.mrb[0].mxu0
        %v484 = vadd.f32 0.0, %v483
        %v485 = vpop.f32.mrb[0].mxu0
        %486 = vmatprep.mubr.f32.mxu0 0.0
        %487 = vmatmul.mubr.f32.gmra.mrb[0].mxu0 %v294
        %v488 = vpop.f32.mrb[0].mxu0
        %v489 = vadd.f32 0.0, %v488
        %v490 = vpop.f32.mrb[0].mxu0
        %491 = vmatprep.mubr.f32.mxu0 0.0
        %492 = vmatmul.mubr.f32.gmra.mrb[0].mxu0 %v295
        %v493 = vpop.f32.mrb[0].mxu0
        %v494 = vadd.f32 0.0, %v493
        %v495 = vpop.f32.mrb[0].mxu0
        %496 = vmatprep.mubr.f32.mxu0 0.0
        %497 = vmatmul.mubr.f32.gmra.mrb[0].mxu0 %v296
        %v498 = vpop.f32.mrb[0].mxu0
        %v499 = vadd.f32 0.0, %v498
        %v500 = vpop.f32.mrb[0].mxu0
        %501 = vmatprep.mubr.f32.mxu0 0.0
        %502 = vmatmul.mubr.f32.gmra.mrb[0].mxu0 %v297
        %v503 = vpop.f32.mrb[0].mxu0
        %v504 = vadd.f32 0.0, %v503
        %v505 = vpop.f32.mrb[0].mxu0
        %506 = vmatprep.mubr.f32.mxu0 0.0
        %507 = vmatmul.mubr.f32.gmra.mrb[0].mxu0 %v298
        %v508 = vpop.f32.mrb[0].mxu0
        %v509 = vadd.f32 0.0, %v508
        %v510 = vpop.f32.mrb[0].mxu0
        %511 = vmatprep.mubr.f32.mxu0 0.0
        %512 = vmatmul.mubr.f32.gmra.mrb[0].mxu0 %v299
        %v513 = vpop.f32.mrb[0].mxu0
        %v514 = vadd.f32 0.0, %v513
        %v515 = vpop.f32.mrb[0].mxu0
        %516 = vmatprep.mubr.f32.mxu0 0.0
        %517 = vmatmul.mubr.f32.gmra.mrb[0].mxu0 %v300
        %v518 = vpop.f32.mrb[0].mxu0
        %v519 = vadd.f32 0.0, %v518
        %v520 = vpop.f32.mrb[0].mxu0
        %521 = vmatprep.mubr.f32.mxu0 0.0
        %522 = vmatmul.mubr.f32.gmra.mrb[0].mxu0 %v301
        %v523 = vpop.f32.mrb[0].mxu0
        %v524 = vadd.f32 0.0, %v523
        %v525 = vpop.f32.mrb[0].mxu0
        %526 = vmatprep.mubr.f32.mxu0 0.0
        %527 = vmatmul.mubr.f32.gmra.mrb[0].mxu0 %v302
        %v528 = vpop.f32.mrb[0].mxu0
        %v529 = vadd.f32 0.0, %v528
        %v530 = vpop.f32.mrb[0].mxu0
        %531 = vmatprep.mubr.f32.mxu0 0.0
        %532 = vmatmul.mubr.f32.gmra.mrb[0].mxu0 %v303
        %v533 = vpop.f32.mrb[0].mxu0
        %v534 = vadd.f32 0.0, %v533
        %v535 = vpop.f32.mrb[0].mxu0
        %536 = vmatprep.mubr.f32.mxu0 0.0
        %537 = vmatmul.mubr.f32.gmra.mrb[0].mxu0 %v304
        %v538 = vpop.f32.mrb[0].mxu0
        %v539 = vadd.f32 0.0, %v538
        %v540 = vpop.f32.mrb[0].mxu0
        %541 = vmatprep.mubr.f32.mxu0 0.0
        %542 = vmatmul.mubr.f32.gmra.mrb[0].mxu0 %v305
        %v543 = vpop.f32.mrb[0].mxu0
        %v544 = vadd.f32 0.0, %v543
        %v545 = vpop.f32.mrb[0].mxu0
        %546 = vmatprep.mubr.f32.mxu0 0.0
        %547 = vmatmul.mubr.f32.gmra.mrb[0].mxu0 %v306
        %v548 = vpop.f32.mrb[0].mxu0
        %v549 = vadd.f32 0.0, %v548
        %v550 = vpop.f32.mrb[0].mxu0
        %551 = vmatprep.mubr.f32.mxu0 0.0
        %552 = vmatmul.mubr.f32.gmra.mrb[0].mxu0 %v307
        %v553 = vpop.f32.mrb[0].mxu0
        %v554 = vadd.f32 0.0, %v553
        %v555 = vpop.f32.mrb[0].mxu0
        %556 = vmatprep.mubr.f32.mxu0 0.0
        %557 = vmatmul.mubr.f32.gmra.mrb[0].mxu0 %v308
        %v558 = vpop.f32.mrb[0].mxu0
        %v559 = vadd.f32 0.0, %v558
        %v560 = vpop.f32.mrb[0].mxu0
        %561 = vmatprep.mubr.f32.mxu0 0.0
        %562 = vmatmul.mubr.f32.gmra.mrb[0].mxu0 %v309
        %v563 = vpop.f32.mrb[0].mxu0
        %v564 = vadd.f32 0.0, %v563
        %v565 = vpop.f32.mrb[0].mxu0
        %566 = vmatprep.mubr.f32.mxu0 0.0
        %567 = vmatmul.mubr.f32.gmra.mrb[0].mxu0 %v310
        %v568 = vpop.f32.mrb[0].mxu0
        %v569 = vadd.f32 0.0, %v568
        %v570 = vpop.f32.mrb[0].mxu0
        %571 = vmatprep.mubr.f32.mxu0 0.0
        %572 = vmatmul.mubr.f32.gmra.mrb[0].mxu0 %v311
        %v573 = vpop.f32.mrb[0].mxu0
        %v574 = vadd.f32 0.0, %v573
        %v575 = vpop.f32.mrb[0].mxu0
        %576 = vmatprep.mubr.f32.mxu0 0.0
        %577 = vmatmul.mubr.f32.gmra.mrb[0].mxu0 %v312
        %v578 = vpop.f32.mrb[0].mxu0
        %v579 = vadd.f32 0.0, %v578
        %v580 = vpop.f32.mrb[0].mxu0
        %581 = vmatprep.mubr.f32.mxu0 0.0
        %582 = vmatmul.mubr.f32.gmra.mrb[0].mxu0 %v313
        %v583 = vpop.f32.mrb[0].mxu0
        %v584 = vadd.f32 0.0, %v583
        %v585 = vpop.f32.mrb[0].mxu0
        %586 = vmatprep.mubr.f32.mxu0 0.0
        %587 = vmatmul.mubr.f32.gmra.mrb[0].mxu0 %v314
        %v588 = vpop.f32.mrb[0].mxu0
        %v589 = vadd.f32 0.0, %v588
        %v590 = vpop.f32.mrb[0].mxu0
        %591 = vmatprep.mubr.f32.mxu0 0.0
        %592 = vmatmul.mubr.f32.gmra.mrb[0].mxu0 %v315
        %v593 = vpop.f32.mrb[0].mxu0
        %v594 = vadd.f32 0.0, %v593
        %v595 = vpop.f32.mrb[0].mxu0
        %596 = vmatprep.mubr.f32.mxu0 0.0
        %597 = vmatmul.mubr.f32.gmra.mrb[0].mxu0 %v316
        %v598 = vpop.f32.mrb[0].mxu0
        %v599 = vadd.f32 0.0, %v598
        %v600 = vpop.f32.mrb[0].mxu0
        %601 = vmatprep.mubr.f32.mxu0 0.0
        %602 = vmatmul.mubr.f32.gmra.mrb[0].mxu0 %v317
        %v603 = vpop.f32.mrb[0].mxu0
        %v604 = vadd.f32 0.0, %v603
        %v605 = vpop.f32.mrb[0].mxu0
        %606 = vmatprep.mubr.f32.mxu0 0.0
        %607 = vmatmul.mubr.f32.gmra.mrb[0].mxu0 %v318
        %v608 = vpop.f32.mrb[0].mxu0
        %v609 = vadd.f32 0.0, %v608
        %v610 = vpop.f32.mrb[0].mxu0
        %611 = vmatprep.mubr.f32.mxu0 0.0
        %612 = vmatmul.mubr.f32.gmra.mrb[0].mxu0 %v319
        %v613 = vpop.f32.mrb[0].mxu0
        %v614 = vadd.f32 0.0, %v613
        %v615 = vpop.f32.mrb[0].mxu0
        %616 = vmatprep.mubr.f32.mxu0 0.0
        %617 = vmatmul.mubr.f32.gmra.mrb[0].mxu0 %v320
        %v618 = vpop.f32.mrb[0].mxu0
        %v619 = vadd.f32 0.0, %v618
        %v620 = vpop.f32.mrb[0].mxu0
        %621 = vmatprep.mubr.f32.mxu0 0.0
        %622 = vmatmul.mubr.f32.gmra.mrb[0].mxu0 %v321
        %v623 = vpop.f32.mrb[0].mxu0
        %v624 = vadd.f32 0.0, %v623
        %v625 = vpop.f32.mrb[0].mxu0
        %626 = vmatprep.mubr.f32.mxu0 0.0
        %627 = vmatmul.mubr.f32.gmra.mrb[0].mxu0 %v322
        %v628 = vpop.f32.mrb[0].mxu0
        %v629 = vadd.f32 0.0, %v628
        %v630 = vpop.f32.mrb[0].mxu0
        %631 = vmatprep.mubr.f32.mxu0 0.0
        %632 = vmatmul.mubr.f32.gmra.mrb[0].mxu0 %v323
        %v633 = vpop.f32.mrb[0].mxu0
        %v634 = vadd.f32 0.0, %v633
        %v635 = vpop.f32.mrb[0].mxu0
        %636 = vmatprep.mubr.f32.mxu0 0.0
        %637 = vmatmul.mubr.f32.gmra.mrb[0].mxu0 %v324
        %v638 = vpop.f32.mrb[0].mxu0
        %v639 = vadd.f32 0.0, %v638
        %v640 = vpop.f32.mrb[0].mxu0
        %641 = vmatprep.mubr.f32.mxu0 0.0
        %642 = vmatmul.mubr.f32.gmra.mrb[0].mxu0 %v325
        %v643 = vpop.f32.mrb[0].mxu0
        %v644 = vadd.f32 0.0, %v643
        %v645 = vpop.f32.mrb[0].mxu0
        %646 = vmatprep.mubr.f32.mxu0 0.0
        %647 = vmatmul.mubr.f32.gmra.mrb[0].mxu0 %v326
        %v648 = vpop.f32.mrb[0].mxu0
        %v649 = vadd.f32 0.0, %v648
        %v650 = vpop.f32.mrb[0].mxu0
        %651 = vmatprep.mubr.f32.mxu0 0.0
        %652 = vmatmul.mubr.f32.gmra.mrb[0].mxu0 %v327
        %v653 = vpop.f32.mrb[0].mxu0
        %v654 = vadd.f32 0.0, %v653
        %v655 = vpop.f32.mrb[0].mxu0
        %656 = vmatprep.mubr.f32.mxu0 0.0
        %657 = vmatmul.mubr.f32.gmra.mrb[0].mxu0 %v328
        %v658 = vpop.f32.mrb[0].mxu0
        %v659 = vadd.f32 0.0, %v658
        %v660 = vpop.f32.mrb[0].mxu0
        %661 = vmatprep.mubr.f32.mxu0 0.0
        %662 = vmatmul.mubr.f32.gmra.mrb[0].mxu0 %v329
        %v663 = vpop.f32.mrb[0].mxu0
        %v664 = vadd.f32 0.0, %v663
        %v665 = vpop.f32.mrb[0].mxu0
        %666 = vmatprep.mubr.f32.mxu0 0.0
        %667 = vmatmul.mubr.f32.gmra.mrb[0].mxu0 %v330
        %v668 = vpop.f32.mrb[0].mxu0
        %v669 = vadd.f32 0.0, %v668
        %v670 = vpop.f32.mrb[0].mxu0
        %671 = vmatprep.mubr.f32.mxu0 0.0
        %672 = vmatmul.mubr.f32.gmra.mrb[0].mxu0 %v331
        %v673 = vpop.f32.mrb[0].mxu0
        %v674 = vadd.f32 0.0, %v673
        %v675 = vpop.f32.mrb[0].mxu0
        %676 = vmatprep.mubr.f32.mxu0 0.0
        %677 = vmatmul.mubr.f32.gmra.mrb[0].mxu0 %v332
        %v678 = vpop.f32.mrb[0].mxu0
        %v679 = vadd.f32 0.0, %v678
        %v680 = vpop.f32.mrb[0].mxu0
        %681 = vmatprep.mubr.f32.mxu0 0.0
        %682 = vmatmul.mubr.f32.gmra.mrb[0].mxu0 %v333
        %v683 = vpop.f32.mrb[0].mxu0
        %v684 = vadd.f32 0.0, %v683
        %v685 = vpop.f32.mrb[0].mxu0
        %686 = vmatprep.mubr.f32.mxu0 0.0
        %687 = vmatmul.mubr.f32.gmra.mrb[0].mxu0 %v334
        %v688 = vpop.f32.mrb[0].mxu0
        %v689 = vadd.f32 0.0, %v688
        %v690 = vpop.f32.mrb[0].mxu0
        %691 = vmatprep.mubr.f32.mxu0 0.0
        %692 = vmatmul.mubr.f32.gmra.mrb[0].mxu0 %v335
        %v693 = vpop.f32.mrb[0].mxu0
        %v694 = vadd.f32 0.0, %v693
        %v695 = vpop.f32.mrb[0].mxu0
        %696 = vmatprep.mubr.f32.mxu0 0.0
        %697 = vmatmul.mubr.f32.gmra.mrb[0].mxu0 %v336
        %v698 = vpop.f32.mrb[0].mxu0
        %v699 = vadd.f32 0.0, %v698
        %v700 = vpop.f32.mrb[0].mxu0
        %701 = vmatprep.mubr.f32.mxu0 0.0
        %702 = vmatmul.mubr.f32.gmra.mrb[0].mxu0 %v337
        %v703 = vpop.f32.mrb[0].mxu0
        %v704 = vadd.f32 0.0, %v703
        %v705 = vpop.f32.mrb[0].mxu0
        %706 = vmatprep.mubr.f32.mxu0 0.0
        %707 = vmatmul.mubr.f32.gmra.mrb[0].mxu0 %v338
        %v708 = vpop.f32.mrb[0].mxu0
        %v709 = vadd.f32 0.0, %v708
        %v710 = vpop.f32.mrb[0].mxu0
        %711 = vmatprep.mubr.f32.mxu0 0.0
        %712 = vmatmul.mubr.f32.gmra.mrb[0].mxu0 %v339
        %v713 = vpop.f32.mrb[0].mxu0
        %v714 = vadd.f32 0.0, %v713
        %v715 = vpop.f32.mrb[0].mxu0
        %716 = vmatprep.mubr.f32.mxu0 0.0
        %717 = vmatmul.mubr.f32.gmra.mrb[0].mxu0 %v340
        %v718 = vpop.f32.mrb[0].mxu0
        %v719 = vadd.f32 0.0, %v718
        %v720 = vpop.f32.mrb[0].mxu0
        %721 = vmatprep.mubr.f32.mxu0 0.0
        %722 = vmatmul.mubr.f32.gmra.mrb[0].mxu0 %v341
        %v723 = vpop.f32.mrb[0].mxu0
        %v724 = vadd.f32 0.0, %v723
        %v725 = vpop.f32.mrb[0].mxu0
        %726 = vmatprep.mubr.f32.mxu0 0.0
        %727 = vmatmul.mubr.f32.gmra.mrb[0].mxu0 %v342
        %v728 = vpop.f32.mrb[0].mxu0
        %v729 = vadd.f32 0.0, %v728
        %v730 = vpop.f32.mrb[0].mxu0
        %731 = vmatprep.mubr.f32.mxu0 0.0
        %732 = vmatmul.mubr.f32.gmra.mrb[0].mxu0 %v343
        %v733 = vpop.f32.mrb[0].mxu0
        %v734 = vadd.f32 0.0, %v733
        %v735 = vpop.f32.mrb[0].mxu0
        %736 = vmatprep.mubr.f32.mxu0 0.0
        %737 = vmatmul.mubr.f32.gmra.mrb[0].mxu0 %v344
        %v738 = vpop.f32.mrb[0].mxu0
        %v739 = vadd.f32 0.0, %v738
        %v740 = vpop.f32.mrb[0].mxu0
        %741 = vmatprep.mubr.f32.mxu0 0.0
        %742 = vmatmul.mubr.f32.gmra.mrb[0].mxu0 %v345
        %v743 = vpop.f32.mrb[0].mxu0
        %v744 = vadd.f32 0.0, %v743
        %v745 = vpop.f32.mrb[0].mxu0
        %746 = vdwg.mxu0
        %v747 = vld [vmem:[%s277] sm:$0x1]
        %v749 = vlaneseq
        %v750 = vshrl.u32 %v749, 7
        %v751 = vsub.s32 0, %v750
        %v752 = vrot.slane %v747, %v751
        %v754 = vmul.f32 %v429, %v752
        %v755 = vmul.f32 %v434, %v752
        %v756 = vmul.f32 %v439, %v752
        %v757 = vmul.f32 %v444, %v752
        %v758 = vmul.f32 %v449, %v752
        %v759 = vmul.f32 %v454, %v752
        %v760 = vmul.f32 %v459, %v752
        %v761 = vmul.f32 %v464, %v752
        %v762 = vmul.f32 %v469, %v752
        %v763 = vmul.f32 %v474, %v752
        %v764 = vmul.f32 %v479, %v752
        %v765 = vmul.f32 %v484, %v752
        %v766 = vmul.f32 %v489, %v752
        %v767 = vmul.f32 %v494, %v752
        %v768 = vmul.f32 %v499, %v752
        %v769 = vmul.f32 %v504, %v752
        %v770 = vmul.f32 %v509, %v752
        %v771 = vmul.f32 %v514, %v752
        %v772 = vmul.f32 %v519, %v752
        %v773 = vmul.f32 %v524, %v752
        %v774 = vmul.f32 %v529, %v752
        %v775 = vmul.f32 %v534, %v752
        %v776 = vmul.f32 %v539, %v752
        %v777 = vmul.f32 %v544, %v752
        %v778 = vmul.f32 %v549, %v752
        %v779 = vmul.f32 %v554, %v752
        %v780 = vmul.f32 %v559, %v752
        %v781 = vmul.f32 %v564, %v752
        %v782 = vmul.f32 %v569, %v752
        %v783 = vmul.f32 %v574, %v752
        %v784 = vmul.f32 %v579, %v752
        %v785 = vmul.f32 %v584, %v752
        %v786 = vmul.f32 %v589, %v752
        %v787 = vmul.f32 %v594, %v752
        %v788 = vmul.f32 %v599, %v752
        %v789 = vmul.f32 %v604, %v752
        %v790 = vmul.f32 %v609, %v752
        %v791 = vmul.f32 %v614, %v752
        %v792 = vmul.f32 %v619, %v752
        %v793 = vmul.f32 %v624, %v752
        %v794 = vmul.f32 %v629, %v752
        %v795 = vmul.f32 %v634, %v752
        %v796 = vmul.f32 %v639, %v752
        %v797 = vmul.f32 %v644, %v752
        %v798 = vmul.f32 %v649, %v752
        %v799 = vmul.f32 %v654, %v752
        %v800 = vmul.f32 %v659, %v752
        %v801 = vmul.f32 %v664, %v752
        %v802 = vmul.f32 %v669, %v752
        %v803 = vmul.f32 %v674, %v752
        %v804 = vmul.f32 %v679, %v752
        %v805 = vmul.f32 %v684, %v752
        %v806 = vmul.f32 %v689, %v752
        %v807 = vmul.f32 %v694, %v752
        %v808 = vmul.f32 %v699, %v752
        %v809 = vmul.f32 %v704, %v752
        %v810 = vmul.f32 %v709, %v752
        %v811 = vmul.f32 %v714, %v752
        %v812 = vmul.f32 %v719, %v752
        %v813 = vmul.f32 %v724, %v752
        %v814 = vmul.f32 %v729, %v752
        %v815 = vmul.f32 %v734, %v752
        %v816 = vmul.f32 %v739, %v752
        %v817 = vmul.f32 %v744, %v752
        %v818 = vld [vmem:[%s280] sm:$0x1]
        %v820 = vlaneseq
        %v821 = vshrl.u32 %v820, 7
        %v822 = vsub.s32 0, %v821
        %v823 = vrot.slane %v818, %v822
        %v825 = vadd.f32 %v754, %v823
        %v826 = vadd.f32 %v755, %v823
        %v827 = vadd.f32 %v756, %v823
        %v828 = vadd.f32 %v757, %v823
        %v829 = vadd.f32 %v758, %v823
        %v830 = vadd.f32 %v759, %v823
        %v831 = vadd.f32 %v760, %v823
        %v832 = vadd.f32 %v761, %v823
        %v833 = vadd.f32 %v762, %v823
        %v834 = vadd.f32 %v763, %v823
        %v835 = vadd.f32 %v764, %v823
        %v836 = vadd.f32 %v765, %v823
        %v837 = vadd.f32 %v766, %v823
        %v838 = vadd.f32 %v767, %v823
        %v839 = vadd.f32 %v768, %v823
        %v840 = vadd.f32 %v769, %v823
        %v841 = vadd.f32 %v770, %v823
        %v842 = vadd.f32 %v771, %v823
        %v843 = vadd.f32 %v772, %v823
        %v844 = vadd.f32 %v773, %v823
        %v845 = vadd.f32 %v774, %v823
        %v846 = vadd.f32 %v775, %v823
        %v847 = vadd.f32 %v776, %v823
        %v848 = vadd.f32 %v777, %v823
        %v849 = vadd.f32 %v778, %v823
        %v850 = vadd.f32 %v779, %v823
        %v851 = vadd.f32 %v780, %v823
        %v852 = vadd.f32 %v781, %v823
        %v853 = vadd.f32 %v782, %v823
        %v854 = vadd.f32 %v783, %v823
        %v855 = vadd.f32 %v784, %v823
        %v856 = vadd.f32 %v785, %v823
        %v857 = vadd.f32 %v786, %v823
        %v858 = vadd.f32 %v787, %v823
        %v859 = vadd.f32 %v788, %v823
        %v860 = vadd.f32 %v789, %v823
        %v861 = vadd.f32 %v790, %v823
        %v862 = vadd.f32 %v791, %v823
        %v863 = vadd.f32 %v792, %v823
        %v864 = vadd.f32 %v793, %v823
        %v865 = vadd.f32 %v794, %v823
        %v866 = vadd.f32 %v795, %v823
        %v867 = vadd.f32 %v796, %v823
        %v868 = vadd.f32 %v797, %v823
        %v869 = vadd.f32 %v798, %v823
        %v870 = vadd.f32 %v799, %v823
        %v871 = vadd.f32 %v800, %v823
        %v872 = vadd.f32 %v801, %v823
        %v873 = vadd.f32 %v802, %v823
        %v874 = vadd.f32 %v803, %v823
        %v875 = vadd.f32 %v804, %v823
        %v876 = vadd.f32 %v805, %v823
        %v877 = vadd.f32 %v806, %v823
        %v878 = vadd.f32 %v807, %v823
        %v879 = vadd.f32 %v808, %v823
        %v880 = vadd.f32 %v809, %v823
        %v881 = vadd.f32 %v810, %v823
        %v882 = vadd.f32 %v811, %v823
        %v883 = vadd.f32 %v812, %v823
        %v884 = vadd.f32 %v813, %v823
        %v885 = vadd.f32 %v814, %v823
        %v886 = vadd.f32 %v815, %v823
        %v887 = vadd.f32 %v816, %v823
        %v888 = vadd.f32 %v817, %v823
        %v889 = vmax.f32 %v825, 0.0
        %v890 = vmax.f32 %v826, 0.0
        %v891 = vmax.f32 %v827, 0.0
        %v892 = vmax.f32 %v828, 0.0
        %v893 = vmax.f32 %v829, 0.0
        %v894 = vmax.f32 %v830, 0.0
        %v895 = vmax.f32 %v831, 0.0
        %v896 = vmax.f32 %v832, 0.0
        %v897 = vmax.f32 %v833, 0.0
        %v898 = vmax.f32 %v834, 0.0
        %v899 = vmax.f32 %v835, 0.0
        %v900 = vmax.f32 %v836, 0.0
        %v901 = vmax.f32 %v837, 0.0
        %v902 = vmax.f32 %v838, 0.0
        %v903 = vmax.f32 %v839, 0.0
        %v904 = vmax.f32 %v840, 0.0
        %v905 = vmax.f32 %v841, 0.0
        %v906 = vmax.f32 %v842, 0.0
        %v907 = vmax.f32 %v843, 0.0
        %v908 = vmax.f32 %v844, 0.0
        %v909 = vmax.f32 %v845, 0.0
        %v910 = vmax.f32 %v846, 0.0
        %v911 = vmax.f32 %v847, 0.0
        %v912 = vmax.f32 %v848, 0.0
        %v913 = vmax.f32 %v849, 0.0
        %v914 = vmax.f32 %v850, 0.0
        %v915 = vmax.f32 %v851, 0.0
        %v916 = vmax.f32 %v852, 0.0
        %v917 = vmax.f32 %v853, 0.0
        %v918 = vmax.f32 %v854, 0.0
        %v919 = vmax.f32 %v855, 0.0
        %v920 = vmax.f32 %v856, 0.0
        %v921 = vmax.f32 %v857, 0.0
        %v922 = vmax.f32 %v858, 0.0
        %v923 = vmax.f32 %v859, 0.0
        %v924 = vmax.f32 %v860, 0.0
        %v925 = vmax.f32 %v861, 0.0
        %v926 = vmax.f32 %v862, 0.0
        %v927 = vmax.f32 %v863, 0.0
        %v928 = vmax.f32 %v864, 0.0
        %v929 = vmax.f32 %v865, 0.0
        %v930 = vmax.f32 %v866, 0.0
        %v931 = vmax.f32 %v867, 0.0
        %v932 = vmax.f32 %v868, 0.0
        %v933 = vmax.f32 %v869, 0.0
        %v934 = vmax.f32 %v870, 0.0
        %v935 = vmax.f32 %v871, 0.0
        %v936 = vmax.f32 %v872, 0.0
        %v937 = vmax.f32 %v873, 0.0
        %v938 = vmax.f32 %v874, 0.0
        %v939 = vmax.f32 %v875, 0.0
        %v940 = vmax.f32 %v876, 0.0
        %v941 = vmax.f32 %v877, 0.0
        %v942 = vmax.f32 %v878, 0.0
        %v943 = vmax.f32 %v879, 0.0
        %v944 = vmax.f32 %v880, 0.0
        %v945 = vmax.f32 %v881, 0.0
        %v946 = vmax.f32 %v882, 0.0
        %v947 = vmax.f32 %v883, 0.0
        %v948 = vmax.f32 %v884, 0.0
        %v949 = vmax.f32 %v885, 0.0
        %v950 = vmax.f32 %v886, 0.0
        %v951 = vmax.f32 %v887, 0.0
        %v952 = vmax.f32 %v888, 0.0
        %953 = vst [vmem:[%s273] sm:$0xff] %v889
        %954 = vst [vmem:[%s273 + $0x8] sm:$0xff] %v890
        %955 = vst [vmem:[%s273 + $0x10] sm:$0xff] %v891
        %956 = vst [vmem:[%s273 + $0x18] sm:$0xff] %v892
        %957 = vst [vmem:[%s273 + $0x20] sm:$0xff] %v893
        %958 = vst [vmem:[%s273 + $0x28] sm:$0xff] %v894
        %959 = vst [vmem:[%s273 + $0x30] sm:$0xff] %v895
        %960 = vst [vmem:[%s273 + $0x38] sm:$0xff] %v896
        %961 = vst [vmem:[%s273 + $0x40] sm:$0xff] %v897
        %962 = vst [vmem:[%s273 + $0x48] sm:$0xff] %v898
        %963 = vst [vmem:[%s273 + $0x50] sm:$0xff] %v899
        %964 = vst [vmem:[%s273 + $0x58] sm:$0xff] %v900
        %965 = vst [vmem:[%s273 + $0x60] sm:$0xff] %v901
        %966 = vst [vmem:[%s273 + $0x68] sm:$0xff] %v902
        %967 = vst [vmem:[%s273 + $0x70] sm:$0xff] %v903
        %968 = vst [vmem:[%s273 + $0x78] sm:$0xff] %v904
        %969 = vst [vmem:[%s273 + $0x80] sm:$0xff] %v905
        %970 = vst [vmem:[%s273 + $0x88] sm:$0xff] %v906
        %971 = vst [vmem:[%s273 + $0x90] sm:$0xff] %v907
        %972 = vst [vmem:[%s273 + $0x98] sm:$0xff] %v908
        %973 = vst [vmem:[%s273 + $0xa0] sm:$0xff] %v909
        %974 = vst [vmem:[%s273 + $0xa8] sm:$0xff] %v910
        %975 = vst [vmem:[%s273 + $0xb0] sm:$0xff] %v911
        %976 = vst [vmem:[%s273 + $0xb8] sm:$0xff] %v912
        %977 = vst [vmem:[%s273 + $0xc0] sm:$0xff] %v913
        %978 = vst [vmem:[%s273 + $0xc8] sm:$0xff] %v914
        %979 = vst [vmem:[%s273 + $0xd0] sm:$0xff] %v915
        %980 = vst [vmem:[%s273 + $0xd8] sm:$0xff] %v916
        %981 = vst [vmem:[%s273 + $0xe0] sm:$0xff] %v917
        %982 = vst [vmem:[%s273 + $0xe8] sm:$0xff] %v918
        %983 = vst [vmem:[%s273 + $0xf0] sm:$0xff] %v919
        %984 = vst [vmem:[%s273 + $0xf8] sm:$0xff] %v920
        %985 = vst [vmem:[%s273 + $0x100] sm:$0xff] %v921
        %986 = vst [vmem:[%s273 + $0x108] sm:$0xff] %v922
        %987 = vst [vmem:[%s273 + $0x110] sm:$0xff] %v923
        %988 = vst [vmem:[%s273 + $0x118] sm:$0xff] %v924
        %989 = vst [vmem:[%s273 + $0x120] sm:$0xff] %v925
        %990 = vst [vmem:[%s273 + $0x128] sm:$0xff] %v926
        %991 = vst [vmem:[%s273 + $0x130] sm:$0xff] %v927
        %992 = vst [vmem:[%s273 + $0x138] sm:$0xff] %v928
        %993 = vst [vmem:[%s273 + $0x140] sm:$0xff] %v929
        %994 = vst [vmem:[%s273 + $0x148] sm:$0xff] %v930
        %995 = vst [vmem:[%s273 + $0x150] sm:$0xff] %v931
        %996 = vst [vmem:[%s273 + $0x158] sm:$0xff] %v932
        %997 = vst [vmem:[%s273 + $0x160] sm:$0xff] %v933
        %998 = vst [vmem:[%s273 + $0x168] sm:$0xff] %v934
        %999 = vst [vmem:[%s273 + $0x170] sm:$0xff] %v935
        %1000 = vst [vmem:[%s273 + $0x178] sm:$0xff] %v936
        %1001 = vst [vmem:[%s273 + $0x180] sm:$0xff] %v937
        %1002 = vst [vmem:[%s273 + $0x188] sm:$0xff] %v938
        %1003 = vst [vmem:[%s273 + $0x190] sm:$0xff] %v939
        %1004 = vst [vmem:[%s273 + $0x198] sm:$0xff] %v940
        %1005 = vst [vmem:[%s273 + $0x1a0] sm:$0xff] %v941
        %1006 = vst [vmem:[%s273 + $0x1a8] sm:$0xff] %v942
        %1007 = vst [vmem:[%s273 + $0x1b0] sm:$0xff] %v943
        %1008 = vst [vmem:[%s273 + $0x1b8] sm:$0xff] %v944
        %1009 = vst [vmem:[%s273 + $0x1c0] sm:$0xff] %v945
        %1010 = vst [vmem:[%s273 + $0x1c8] sm:$0xff] %v946
        %1011 = vst [vmem:[%s273 + $0x1d0] sm:$0xff] %v947
        %1012 = vst [vmem:[%s273 + $0x1d8] sm:$0xff] %v948
        %1013 = vst [vmem:[%s273 + $0x1e0] sm:$0xff] %v949
        %1014 = vst [vmem:[%s273 + $0x1e8] sm:$0xff] %v950
        %1015 = vst [vmem:[%s273 + $0x1f0] sm:$0xff] %v951
        %1016 = vst [vmem:[%s273 + $0x1f8] sm:$0xff] %v952
        %s1017 = sand.u32 %s148, 1
        %s1018 = scalar_lea.sflag [#allocation4], %s1017
        %s1019 = sand.u32 %s148, 1
        %s1020 = smul.addr %s1019, 512
        %s1021 = scalar_lea.vmem [#allocation7], %s1020
        // Predicated region
        $region45: #{tpu_custom_call.1} parent=35 // pred_check
          %p1022 = pneg %p158
        $region46: #{tpu_custom_call.1} parent=35 // pred_check_branch
          %1024 = sbr.rel (%p1022) target = $region48
        $region47: #{tpu_custom_call.1} parent=35 // pred_region
          %s1025 = smul.u32 64, %s26
          %s1027 = ssub.s32 8192, 8192
          %1028 = vsyncadd %s1018, %s1027
          %s1029 = sadd.s32 %s27, %s1025
          %s1030 = smul.addr %s1029, 128
          %s1031 = scalar_lea.hbm %s4, %s1030
          %s1032 = sshll.u32 %s1021, 4
          %s1033 = int_to_ptr.vmem [resolvable:$true] %s1032
          %1038 = dma.vmem_to_hbm [thread:$0]  %s1033, 8192, %s1031, %s1018, 128, 128, 8
        $region48: #{tpu_custom_call.1} parent=35 // pred_fallthru
          _
      $region36: #{tpu_custom_call.1} parent=5 // pred_fallthru
        _
      %p1039 = scmp.le.s32.totalorder 2, %s17
      // Predicated region
      $region49: #{tpu_custom_call.1} parent=5 // pred_check
        %p1040 = pneg %p1039
      $region50: #{tpu_custom_call.1} parent=5 // pred_check_branch
        %1042 = sbr.rel (%p1040) target = $region52
      $region51: #{tpu_custom_call.1} parent=5 // pred_region
        %s1043 = ssub.s32 %s17, 2
        // Predicated region
        $region53: #{tpu_custom_call.1} parent=51 // pred_check
          %p1044 = pneg %p164
        $region54: #{tpu_custom_call.1} parent=51 // pred_check_branch
          %1046 = sbr.rel (%p1044) target = $region56
        $region55: #{tpu_custom_call.1} parent=51 // pred_region
          %s1047 = sand.u32 %s149, 1
          %s1048 = scalar_lea.sflag [#allocation4], %s1047
          %s1049 = sand.u32 %s149, 1
          %s1050 = smul.addr %s1049, 512
          %s1051 = scalar_lea.vmem [#allocation7], %s1050
          %1052 = dma.done %s1048, 8192
        $region56: #{tpu_custom_call.1} parent=51 // pred_fallthru
          _
      $region52: #{tpu_custom_call.1} parent=5 // pred_fallthru
        _
    $region6: #{tpu_custom_call.1} parent=1 // loop_footer
      %s21 = sadd.s32 1, %s17
    $region7: #{tpu_custom_call.1} parent=1 // loop_footer_branch
      %16 = sbr.rel target = $region3
    $region8: #{tpu_custom_call.1} parent=1 // loop_exit
      _
    %1053 = vsyncpa [#allocation3], 1
    %s1054 = scalar_lea.sflag [#allocation3], 1
    %1055 = vsyncpa %s1054, 1
    %1056 = vsyncpa [#allocation6], 1
    %1057 = vsyncpa [#allocation4], 1
    %s1058 = scalar_lea.sflag [#allocation4], 1
    %1059 = vsyncpa %s1058, 1

</llo_original>
